<compile_context>
chip_gen: v5e
topology: v5e:2x2
jax: 0.10.0
libtpu: 0.0.40
codegen_flags: <defaults>
</compile_context>

<pallas_src>
import jax
import jax.numpy as jnp
from jax import lax
from jax.experimental import pallas as pl
from jax.experimental.pallas import tpu as pltpu

_EPS = 1e-12

# Candidate (tm, tn) tiles, largest first; all lane/sublane aligned (8, 128),
# tn preferring multiples of 512 so all four 128x128 MXUs on v5e stay fed.
_TILE_CANDIDATES = (
    (512, 1024),
    (256, 1024),
    (512, 512),
    (256, 512),
    (256, 256),
    (128, 256),
    (128, 128),
)


def _nl_kernel_col_scale(x_ref, w_ref, inv_ref, o_ref):
    """norm_dim_in=True: one (tm, tn) tile of y = (x @ w.T) * inv_col.

    x_ref:   (tm, dim)      activation tile
    w_ref:   (tn, dim)      raw (unnormalized) PyTorch-layout weight tile
    inv_ref: (1, tn) f32    reciprocal L2 norm per output column (lane-dense)
    o_ref:   (tm, tn)
    """
    acc = lax.dot_general(
        x_ref[...],
        w_ref[...],
        dimension_numbers=(((1,), (1,)), ((), ())),  # contract last axes
        preferred_element_type=jnp.float32,
    )
    o_ref[...] = (acc * inv_ref[...]).astype(o_ref.dtype)


def _nl_kernel_row_scale(x_ref, w_ref, inv_ref, o_ref):
    """norm_dim_in=False: one (tm, tn) tile of y = (x * inv_k) @ w.T.

    x_ref:   (tm, dim)
    w_ref:   (tn, dim)
    inv_ref: (1, dim) f32   reciprocal L2 norm per input feature
    o_ref:   (tm, tn)
    """
    x = x_ref[...]
    xs = (x.astype(jnp.float32) * inv_ref[...]).astype(x.dtype)
    o_ref[...] = lax.dot_general(
        xs,
        w_ref[...],
        dimension_numbers=(((1,), (1,)), ((), ())),
        preferred_element_type=jnp.float32,
    ).astype(o_ref.dtype)


def _vmem_capacity_bytes():
    """Query physical VMEM; conservative (v7x-sized) fallback if unavailable."""
    try:
        info = pltpu.get_tpu_info()
        cap = getattr(info, "vmem_capacity_bytes", None)
        if cap:
            return int(cap)
    except Exception:  # pragma: no cover - query can fail off-TPU / interpret
        pass
    return 64 * 1024 * 1024


def _select_tiles(m, dim_out, dim, x_bytes, w_bytes, out_bytes, budget):
    """Pick the largest (tm, tn) whose double-buffered footprint fits `budget`."""
    chosen = None
    for tm_c, tn_c in _TILE_CANDIDATES:
        tm = tm_c if m > tm_c else m
        tn = tn_c if dim_out > tn_c else dim_out
        chosen = (tm, tn)
        footprint = (
            2 * tm * dim * x_bytes        # double-buffered x tiles
            + 2 * tn * dim * w_bytes      # double-buffered weight tiles
            + 2 * tm * tn * out_bytes     # double-buffered output tiles
            + 2 * (dim + dim_out) * 4     # inv_norm blocks (tiny)
        )
        if footprint <= budget:
            return tm, tn
    return chosen  # smallest candidate as fallback


def norm_linear(x, weight, *, norm_dim_in: bool = True):
    """Pallas NormLinear forward.

    x:      (..., dim)
    weight: (dim_out, dim)   (PyTorch Linear layout)
    returns (..., dim_out)
    """
    *lead, dim = x.shape
    dim_out, dim_w = weight.shape
    assert dim == dim_w, f"dim mismatch: {dim} vs {dim_w}"

    x2 = x.reshape(-1, dim)
    m = x2.shape[0]

    # Hoisted normalization: reciprocal L2 norm of the *full* weight, once.
    # max(||w||, eps) == sqrt(max(sum(w^2), eps^2))  (matches F.normalize).
    w32 = weight.astype(jnp.float32)
    axis = -1 if norm_dim_in else 0
    sumsq = jnp.sum(w32 * w32, axis=axis, keepdims=True)
    inv_norm = lax.rsqrt(jnp.maximum(sumsq, _EPS * _EPS))
    # Lane-dense layouts: (1, dim_out) per output column / (1, dim) per K element.
    inv_norm = inv_norm.reshape(1, dim_out) if norm_dim_in else inv_norm.reshape(1, dim)

    # Generation-aware VMEM budget: ~3/4 of physical, capped at 112 MiB.
    #   v7x (64 MiB)       -> 48 MiB
    #   v5e/v6e (128 MiB)  -> 96 MiB  (well above v5e's 16 MiB default scoped limit)
    cap = _vmem_capacity_bytes()
    budget = min(cap * 3 // 4, 112 * 1024 * 1024)

    tm, tn = _select_tiles(
        m, dim_out, dim,
        x2.dtype.itemsize, weight.dtype.itemsize, x2.dtype.itemsize,
        budget,
    )
    nm = pl.cdiv(m, tm)
    nn = pl.cdiv(dim_out, tn)

    if norm_dim_in:
        kernel = _nl_kernel_col_scale
        inv_spec = pl.BlockSpec((1, tn), lambda j, i: (0, j))
    else:
        kernel = _nl_kernel_row_scale
        inv_spec = pl.BlockSpec((1, dim), lambda j, i: (0, 0))

    out = pl.pallas_call(
        kernel,
        out_shape=jax.ShapeDtypeStruct((m, dim_out), x.dtype),
        grid_spec=pltpu.PrefetchScalarGridSpec(
            num_scalar_prefetch=0,
            # N outermost, M innermost: the weight (and inv_norm) tile index is
            # constant across the inner M axis, so it stays VMEM-resident while
            # x tiles stream.
            grid=(nn, nm),
            in_specs=[
                pl.BlockSpec((tm, dim), lambda j, i: (i, 0)),   # x
                pl.BlockSpec((tn, dim), lambda j, i: (j, 0)),   # weight
                inv_spec,                                       # inv_norm
            ],
            out_specs=pl.BlockSpec((tm, tn), lambda j, i: (i, j)),
        ),
        compiler_params=pltpu.CompilerParams(
            # Both axes are independent output tiles (K un-tiled) -> megacore
            # shards the outer (weight) axis on v7x; no-op on v5e/v6e.
            dimension_semantics=("parallel", "parallel"),
            vmem_limit_bytes=int(budget),
        ),
    )(x2, weight, inv_norm)

    return out.reshape(*lead, dim_out)


def _reference(x, weight, *, norm_dim_in: bool = True):
    w = weight.astype(jnp.float32)
    axis = -1 if norm_dim_in else 0
    norm = jnp.sqrt(jnp.sum(w * w, axis=axis, keepdims=True))
    w_n = w / jnp.maximum(norm, _EPS)
    y = jnp.einsum(
        "...d,od->...o",
        x.astype(jnp.float32),
        w_n,
        precision=jax.lax.Precision.HIGHEST,
    )
    return y.astype(x.dtype)


if __name__ == "__main__":
    key = jax.random.PRNGKey(0)
    k_x, k_w, k_x2, k_w2 = jax.random.split(key, 4)

    # Tolerances are loose enough to absorb TPU matmul pass-precision
    # differences between the Pallas MXU path and the XLA reference.
    ATOL = RTOL = 2e-2

    # --- small test at module-like shapes ---
    batch, seq, dim, dim_out = 2, 8, 32, 64
    x = jax.random.normal(k_x, (batch, seq, dim), dtype=jnp.float32)
    bound = 1.0 / (dim ** 0.5)
    weight = jax.random.uniform(
        k_w, (dim_out, dim), dtype=jnp.float32, minval=-bound, maxval=bound
    )

    for ndi in (True, False):
        y = jax.block_until_ready(norm_linear(x, weight, norm_dim_in=ndi))
        y_ref = _reference(x, weight, norm_dim_in=ndi)
        assert y.shape == (batch, seq, dim_out), y.shape
        assert jnp.allclose(y, y_ref, atol=ATOL, rtol=RTOL), (
            f"mismatch (norm_dim_in={ndi})"
        )

    # --- multi-block / ragged-edge tiled path ---
    m2, dim2, dim_out2 = 768, 128, 1536   # ragged along both grid axes
    x_big = jax.random.normal(k_x2, (m2, dim2), dtype=jnp.float32)
    bound2 = 1.0 / (dim2 ** 0.5)
    w_big = jax.random.uniform(
        k_w2, (dim_out2, dim2), dtype=jnp.float32, minval=-bound2, maxval=bound2
    )
    for ndi in (True, False):
        y_big = jax.block_until_ready(norm_linear(x_big, w_big, norm_dim_in=ndi))
        y_big_ref = _reference(x_big, w_big, norm_dim_in=ndi)
        assert y_big.shape == (m2, dim_out2)
        assert jnp.allclose(y_big, y_big_ref, atol=ATOL, rtol=RTOL), (
            f"mismatch (tiled path, norm_dim_in={ndi})"
        )

    print("KERNEL_OK")
</pallas_src>

<mosaic_0001>
module attributes {stable_mosaic.version = 11 : i64} {
  func.func @_nl_kernel_col_scale(%arg0: i32, %arg1: i32, %arg2: memref<16x32xf32, #tpu.memory_space<vmem>>, %arg3: memref<64x32xf32, #tpu.memory_space<vmem>>, %arg4: memref<1x64xf32, #tpu.memory_space<vmem>>, %arg5: memref<16x64xf32, #tpu.memory_space<vmem>>) attributes {dimension_semantics = [#tpu.dimension_semantics<parallel>, #tpu.dimension_semantics<parallel>], iteration_bounds = array<i64: 1, 1>, scalar_prefetch = 0 : i64, scratch_operands = 0 : i64, tpu.core_type = #tpu.core_type<tc>, window_params = [{transform_indices = @transform_0, window_bounds = array<i64: 16, 32>}, {transform_indices = @transform_1, window_bounds = array<i64: 64, 32>}, {transform_indices = @transform_2, window_bounds = array<i64: 1, 64>}, {transform_indices = @transform_3, window_bounds = array<i64: 16, 64>}]} {
    %c0 = arith.constant 0 : index
    %c0_0 = arith.constant 0 : index
    %0 = vector.load %arg2[%c0, %c0_0] : memref<16x32xf32, #tpu.memory_space<vmem>>, vector<16x32xf32>
    %c0_1 = arith.constant 0 : index
    %c0_2 = arith.constant 0 : index
    %1 = vector.load %arg3[%c0_1, %c0_2] : memref<64x32xf32, #tpu.memory_space<vmem>>, vector<64x32xf32>
    %cst = arith.constant dense<0.000000e+00> : vector<16x64xf32>
    %2 = tpu.matmul %0, %1, %cst {dimension_numbers = #tpu.dot_dimension_numbers<[1], [1], [0], [0], [0, 0, 1, 0], [], []>} : vector<16x32xf32>, vector<64x32xf32>, vector<16x64xf32> -> vector<16x64xf32>
    %c0_3 = arith.constant 0 : index
    %c0_4 = arith.constant 0 : index
    %3 = vector.load %arg4[%c0_3, %c0_4] : memref<1x64xf32, #tpu.memory_space<vmem>>, vector<1x64xf32>
    %4 = vector.broadcast %3 : vector<1x64xf32> to vector<16x64xf32>
    %5 = arith.mulf %2, %4 : vector<16x64xf32>
    %c0_5 = arith.constant 0 : index
    %c0_6 = arith.constant 0 : index
    %6 = vector.load %arg5[%c0_5, %c0_6] : memref<16x64xf32, #tpu.memory_space<vmem>>, vector<16x64xf32>
    tpu.vector_store %arg5[%c0_5, %c0_6], %5 {strides = array<i32>} : memref<16x64xf32, #tpu.memory_space<vmem>>, vector<16x64xf32>,
    return
  }
  func.func @transform_0(%arg0: i32, %arg1: i32) -> (i32, i32) {
    %c0_i32 = arith.constant 0 : i32
    %c0_i32_0 = arith.constant 0 : i32
    return %arg1, %c0_i32 : i32, i32
  }
  func.func @transform_1(%arg0: i32, %arg1: i32) -> (i32, i32) {
    %c0_i32 = arith.constant 0 : i32
    %c0_i32_0 = arith.constant 0 : i32
    return %arg0, %c0_i32 : i32, i32
  }
  func.func @transform_2(%arg0: i32, %arg1: i32) -> (i32, i32) {
    %c0_i32 = arith.constant 0 : i32
    %c0_i32_0 = arith.constant 0 : i32
    return %c0_i32, %arg0 : i32, i32
  }
  func.func @transform_3(%arg0: i32, %arg1: i32) -> (i32, i32) {
    %c0_i32 = arith.constant 0 : i32
    return %arg1, %arg0 : i32, i32
  }
}

</mosaic_0001>

<llo_original>
// kernel: tpu_custom_call.1
$region0: #{tpu_custom_call.1}
  #allocation0 [shape = 'u32[]', space=smem, size = 0x4, offset = 0x4, fixed_abs, tag = 'smem constant byte address 0x4 - core index']
  #allocation1 [shape = 'u32[72,128]{1,0:T(1,128)}', space=vmem, size = 0x9000, scoped, tag = 'internal scratch']
  %s0 = inlined_call_operand.vmem [shape: f32[16,32], index: 0, kind: input, shape index: {}]
  %s1 = inlined_call_operand.vmem [shape: f32[64,32], index: 1, kind: input, shape index: {}]
  %s2 = inlined_call_operand.vmem [shape: f32[1,64], index: 2, kind: input, shape index: {}]
  %s3 = inlined_call_operand.hbm [shape: f32[16,64], index: 3, kind: output, shape index: {}]
  %s4 = sld [smem:[#allocation0]]
  $region22: #{tpu_custom_call.1} parent=0
    _
  %s6 = ssub.s32 1, %s4
  %s7 = scalar_select 0, %s6, %s4
  $region1: #{tpu_custom_call.1} parent=0
    #allocation2 [shape = 'u8[8192]{0}', space=vmem, size = 0x2000, scoped, tag = 'output window, operand 0, single buffered']
    #allocation3 [shape = 's32[1]{0}', space=sflag, size = 0x4, scoped, tag = 'scoped memory for tpu_custom_call.1']
    %8 = vsyncpa [#allocation3], 0
    // Predicated region
    $region2: #{tpu_custom_call.1} parent=1 // pred_check
      _
    $region3: #{tpu_custom_call.1} parent=1 // pred_check_branch
      %10 = sbr.rel (0) target = $region5
    $region4: #{tpu_custom_call.1} parent=1 // pred_region
      _
    $region5: #{tpu_custom_call.1} parent=1 // pred_fallthru
      _
    // Predicated region
    $region6: #{tpu_custom_call.1} parent=1 // pred_check
      _
    $region7: #{tpu_custom_call.1} parent=1 // pred_check_branch
      %12 = sbr.rel (0) target = $region9
    $region8: #{tpu_custom_call.1} parent=1 // pred_region
      _
    $region9: #{tpu_custom_call.1} parent=1 // pred_fallthru
      _
    // Predicated region
    $region10: #{tpu_custom_call.1} parent=1 // pred_check
      _
    $region11: #{tpu_custom_call.1} parent=1 // pred_check_branch
      %14 = sbr.rel (0) target = $region13
    $region12: #{tpu_custom_call.1} parent=1 // pred_region
      _
    $region13: #{tpu_custom_call.1} parent=1 // pred_fallthru
      _
    %v15 = vld [vmem:[%s0] sm:$0xff]
    %v16 = vld [vmem:[%s0 + $0x8] sm:$0xff]
    %v17 = vld [vmem:[%s1] sm:$0xff]
    %v18 = vld [vmem:[%s1 + $0x8] sm:$0xff]
    %v19 = vld [vmem:[%s1 + $0x10] sm:$0xff]
    %v20 = vld [vmem:[%s1 + $0x18] sm:$0xff]
    %v21 = vld [vmem:[%s1 + $0x20] sm:$0xff]
    %v22 = vld [vmem:[%s1 + $0x28] sm:$0xff]
    %v23 = vld [vmem:[%s1 + $0x30] sm:$0xff]
    %v24 = vld [vmem:[%s1 + $0x38] sm:$0xff]
    %vm25 = vcmask 261120
    %v27 = vsel %vm25, %v15, 0
    %v30 = vsel %vm25, %v16, 0
    %v33 = vsel %vm25, %v17, 0
    %v36 = vsel %vm25, %v18, 0
    %v39 = vsel %vm25, %v19, 0
    %v42 = vsel %vm25, %v20, 0
    %v45 = vsel %vm25, %v21, 0
    %v48 = vsel %vm25, %v22, 0
    %v51 = vsel %vm25, %v23, 0
    %v54 = vsel %vm25, %v24, 0
    %56 = vmatpush.xpose.msra.mxu0 0.0
    %57 = vmatpush.xpose.msra.mxu0 0.0
    %58 = vmatpush.xpose.msra.mxu0 0.0
    %59 = vmatpush.xpose.msra.mxu0 0.0
    %60 = vmatpush.xpose.msra.mxu0 0.0
    %61 = vmatpush.xpose.msra.mxu0 0.0
    %62 = vmatpush.xpose.msra.mxu0 0.0
    %63 = vmatpush.xpose.msra.mxu0 0.0
    %64 = vmatpush.xpose.msra.mxu0 %v54
    %65 = vmatpush.xpose.msra.mxu0 %v51
    %66 = vmatpush.xpose.msra.mxu0 %v48
    %67 = vmatpush.xpose.msra.mxu0 %v45
    %68 = vmatpush.xpose.msra.mxu0 %v42
    %69 = vmatpush.xpose.msra.mxu0 %v39
    %70 = vmatpush.xpose.msra.mxu0 %v36
    %71 = vmatpush.xpose.msra.mxu0 %v33
    %72 = vmatmul.f32.gmra.mxu0 %v27
    %v73 = vpop.f32.mrf.mxu0
    %v74 = vadd.f32 0.0, %v73
    %75 = vmatmul.f32.gmra.mxu0 %v30
    %v76 = vpop.f32.mrf.mxu0
    %v77 = vadd.f32 0.0, %v76
    %78 = vdwg.mxu0
    %v79 = vld [vmem:[%s2] sm:$0x1]
    %v81 = vperm.slane %v79, 0
    %v83 = vmul.f32 %v74, %v81
    %v84 = vmul.f32 %v77, %v81
    %vm85 = vcmask 523264
    %86 = vst.msk [vmem:[#allocation2] sm:$0xff] %vm85, %v83
    %87 = vst.msk [vmem:[#allocation2 + $0x8] sm:$0xff] %vm85, %v84
    // Predicated region
    $region14: #{tpu_custom_call.1} parent=1 // pred_check
      _
    $region15: #{tpu_custom_call.1} parent=1 // pred_check_branch
      %89 = sbr.rel (0) target = $region17
    $region16: #{tpu_custom_call.1} parent=1 // pred_region
      %91 = vsyncadd [#allocation3], 0
      %s92 = sshll.u32 [#allocation2], 4
      %s93 = int_to_ptr.vmem [resolvable:$true] %s92
      %s94 = sshll.u32 %s3, 4
      %s95 = int_to_ptr.hbm [resolvable:$true] %s94
      %100 = dma.vmem_to_hbm [thread:$0]  %s93, 256, %s95, [#allocation3], 128, 128, 8
    $region17: #{tpu_custom_call.1} parent=1 // pred_fallthru
      _
    // Predicated region
    $region18: #{tpu_custom_call.1} parent=1 // pred_check
      _
    $region19: #{tpu_custom_call.1} parent=1 // pred_check_branch
      %102 = sbr.rel (0) target = $region21
    $region20: #{tpu_custom_call.1} parent=1 // pred_region
      %104 = dma.done [#allocation3], 256
    $region21: #{tpu_custom_call.1} parent=1 // pred_fallthru
      _
    %105 = vsyncpa [#allocation3], 1

</llo_original>
